<compile_context>
chip_gen: v5e
topology: v5e:2x2
jax: 0.10.0
libtpu: 0.0.40
codegen_flags: <defaults>
</compile_context>

<pallas_src>
import jax
import jax.numpy as jnp
from jax.experimental import pallas as pl
from jax.experimental.pallas import tpu as pltpu

_LANE = 128
_FAST_PATH_BYTES = 1 << 20  # below this, letting XLA emit the broadcast wins


def _router_prompt_kernel(p_ref, o_ref):
    # p_ref: (1, ld_tile) parameter slice; o_ref: (bt, ld_tile) output tile.
    # Sublane broadcast on the VPU; the HBM writeback DMA is the bottleneck.
    o_ref[...] = jnp.broadcast_to(p_ref[...], o_ref.shape)


def _vmem_capacity_bytes() -> int:
    """Per-TensorCore VMEM capacity (generation aware) with a safe fallback."""
    try:
        cap = int(getattr(pltpu.get_tpu_info(), "vmem_capacity_bytes", 0))
        if cap > 0:
            return cap
    except Exception:
        pass
    return 64 << 20  # conservative: v7x per-core physical VMEM


def _sublane(itemsize: int) -> int:
    # Native sublane tile: 8 for 32-bit, 16 for bf16, 32 for int8, ...
    return 8 * max(1, 4 // max(1, itemsize))


def _choose_tiles(batch_size: int, LD: int, itemsize: int,
                  max_tile_bytes: int):
    """Pick (bt, ld_tile) for (bt, ld_tile)-shaped output blocks."""
    row_bytes = LD * itemsize
    total_bytes = batch_size * row_bytes
    sub = _sublane(itemsize)

    # Per-step output tile target: ~8 MiB (amortize ~0.35us/step), bounded by
    # the VMEM budget, with enough grid steps that both v7x TCs get work.
    target = min(8 << 20, max_tile_bytes)
    if total_bytes >= (16 << 20):
        target = min(target, pl.cdiv(total_bytes, 4))   # >=4 steps (2 per TC)
    elif total_bytes >= (2 << 20):
        target = min(target, pl.cdiv(total_bytes, 2))   # >=2 steps
    target = max(target, min(total_bytes, 1 << 20))

    min_row_group = row_bytes * min(batch_size, sub)
    if LD <= _LANE or min_row_group <= target:
        # Full L*D rows per block; tile only the batch axis.
        ld_tile = LD
        bt = max(1, target // max(row_bytes, 1))
        if bt >= batch_size:
            bt = batch_size
        else:
            bt = min(batch_size, max(sub, (bt // sub) * sub))
    else:
        # Rows too fat: tile the flattened L*D axis (multiples of 128) so
        # every step stays near `target` and VMEM can never overflow.
        bt = batch_size if batch_size <= sub else sub
        ld_tile = max(_LANE, (target // (bt * itemsize)) // _LANE * _LANE)
        ld_tile = min(ld_tile, LD)
    return bt, ld_tile


def router_prompt_forward(prompt_tokens: jax.Array, batch_size: int,
                          *, force_pallas: bool = False) -> jax.Array:
    """Replicates prompt_tokens (1, L, D) across batch -> (batch_size, L, D)."""
    _, L, D = prompt_tokens.shape
    dtype = prompt_tokens.dtype
    itemsize = jnp.dtype(dtype).itemsize
    LD = L * D
    total_bytes = batch_size * LD * itemsize

    # Host-side fast path for small outputs: kernel launch cost dominates.
    if not force_pallas and total_bytes < _FAST_PATH_BYTES:
        return jnp.broadcast_to(prompt_tokens, (batch_size, L, D))

    cap = _vmem_capacity_bytes()
    budget = (cap * 3) // 4                           # leave compiler scratch headroom
    max_tile_bytes = max((budget - (4 << 20)) // 2, 1 << 20)

    bt, ld_tile = _choose_tiles(batch_size, LD, itemsize, max_tile_bytes)

    in_tile_bytes = ld_tile * itemsize
    out_tile_bytes = bt * ld_tile * itemsize
    # Exact footprint: double-buffered input + double-buffered output + slack.
    vmem_needed = 2 * in_tile_bytes + 2 * out_tile_bytes + (2 << 20)
    vmem_limit = int(min(max(vmem_needed, 16 << 20), budget))

    # Flatten (L, D) -> (L*D,) so stores are lane-dense regardless of D.
    p_flat = prompt_tokens.reshape(1, LD)
    grid = (pl.cdiv(LD, ld_tile), pl.cdiv(batch_size, bt))

    out_flat = pl.pallas_call(
        _router_prompt_kernel,
        out_shape=jax.ShapeDtypeStruct((batch_size, LD), dtype),
        grid_spec=pltpu.PrefetchScalarGridSpec(
            num_scalar_prefetch=0,
            grid=grid,
            # L*D is the OUTER grid axis: the parameter block index does not
            # change across the inner batch axis, so each slice is fetched
            # into VMEM once and reused for every batch block.
            in_specs=[pl.BlockSpec((1, ld_tile), lambda j, i: (0, j))],
            out_specs=pl.BlockSpec((bt, ld_tile), lambda j, i: (i, j)),
        ),
        compiler_params=pltpu.CompilerParams(
            dimension_semantics=("parallel", "parallel"),
            vmem_limit_bytes=vmem_limit,
        ),
    )(p_flat)

    return out_flat.reshape(batch_size, L, D)


class RouterPromptPallas:
    """JAX/Pallas equivalent of the PyTorch RouterPrompt module."""

    def __init__(self, prompt_length: int = 7, num_sentences: int = 10,
                 embed_dim: int = 768, key=None, dtype=jnp.float32):
        if key is None:
            key = jax.random.PRNGKey(0)
        L = num_sentences * prompt_length
        # nn.Parameter(torch.randn(1, L, D) * 0.02) — deterministic init here.
        self.prompt_tokens = (
            jax.random.normal(key, (1, L, embed_dim), dtype=dtype) * 0.02
        )

    def __call__(self, batch_size: int, *, force_pallas: bool = False) -> jax.Array:
        return router_prompt_forward(self.prompt_tokens, batch_size,
                                     force_pallas=force_pallas)


if __name__ == "__main__":
    key = jax.random.PRNGKey(0)

    # 1) Small module-consistent shapes, forced through the Pallas path
    #    (batch=2, L=8, D=32 -> single full-block grid step).
    small = RouterPromptPallas(prompt_length=4, num_sentences=2,
                               embed_dim=32, key=key)
    out = jax.block_until_ready(small(2, force_pallas=True))
    ref = jnp.broadcast_to(small.prompt_tokens,
                           (2,) + small.prompt_tokens.shape[1:])
    assert out.shape == (2, 8, 32), out.shape
    assert out.dtype == small.prompt_tokens.dtype
    assert jnp.array_equal(out, ref)

    # 2) Default prompt size (L=70, D=768) with batch=12: takes the Pallas
    #    path naturally and exercises multi-step grid with partial tiles on
    #    both the batch and the L*D axes.
    full = RouterPromptPallas(prompt_length=7, num_sentences=10,
                              embed_dim=768, key=jax.random.PRNGKey(1))
    b = 12
    out2 = jax.block_until_ready(full(b))
    ref2 = jnp.broadcast_to(full.prompt_tokens,
                            (b,) + full.prompt_tokens.shape[1:])
    assert out2.shape == (b, 70, 768), out2.shape
    assert jnp.array_equal(out2, ref2)

    # 3) Tiny batch takes the host-side fast path (pure broadcast).
    out3 = jax.block_until_ready(small(2))
    assert jnp.array_equal(out3, ref)

    print("KERNEL_OK")
</pallas_src>

<mosaic_0001>
module attributes {stable_mosaic.version = 11 : i64} {
  func.func @_router_prompt_kernel(%arg0: i32, %arg1: i32, %arg2: memref<1x256xf32, #tpu.memory_space<vmem>>, %arg3: memref<2x256xf32, #tpu.memory_space<vmem>>) attributes {dimension_semantics = [#tpu.dimension_semantics<parallel>, #tpu.dimension_semantics<parallel>], iteration_bounds = array<i64: 1, 1>, scalar_prefetch = 0 : i64, scratch_operands = 0 : i64, tpu.core_type = #tpu.core_type<tc>, window_params = [{transform_indices = @transform_0, window_bounds = array<i64: 1, 256>}, {transform_indices = @transform_1, window_bounds = array<i64: 2, 256>}]} {
    %c0 = arith.constant 0 : index
    %c0_0 = arith.constant 0 : index
    %0 = vector.load %arg2[%c0, %c0_0] : memref<1x256xf32, #tpu.memory_space<vmem>>, vector<1x256xf32>
    %1 = vector.shape_cast %0 : vector<1x256xf32> to vector<1x256xf32>
    %2 = vector.broadcast %1 : vector<1x256xf32> to vector<2x256xf32>
    %c0_1 = arith.constant 0 : index
    %c0_2 = arith.constant 0 : index
    %3 = vector.load %arg3[%c0_1, %c0_2] : memref<2x256xf32, #tpu.memory_space<vmem>>, vector<2x256xf32>
    tpu.vector_store %arg3[%c0_1, %c0_2], %2 {strides = array<i32>} : memref<2x256xf32, #tpu.memory_space<vmem>>, vector<2x256xf32>,
    return
  }
  func.func @transform_0(%arg0: i32, %arg1: i32) -> (i32, i32) {
    %c0_i32 = arith.constant 0 : i32
    %c0_i32_0 = arith.constant 0 : i32
    return %c0_i32, %arg0 : i32, i32
  }
  func.func @transform_1(%arg0: i32, %arg1: i32) -> (i32, i32) {
    %c0_i32 = arith.constant 0 : i32
    return %arg1, %arg0 : i32, i32
  }
}

</mosaic_0001>

<llo_original>
// kernel: tpu_custom_call.1
$region0: #{tpu_custom_call.1}
  #allocation0 [shape = 'u32[]', space=smem, size = 0x4, offset = 0x4, fixed_abs, tag = 'smem constant byte address 0x4 - core index']
  #allocation1 [shape = 'u32[72,128]{1,0:T(1,128)}', space=vmem, size = 0x9000, scoped, tag = 'internal scratch']
  %s0 = inlined_call_operand.hbm [shape: f32[1,256], index: 0, kind: input, shape index: {}]
  %s1 = inlined_call_operand.hbm [shape: f32[2,256], index: 1, kind: output, shape index: {}]
  %s2 = sld [smem:[#allocation0]]
  $region18: #{tpu_custom_call.1} parent=0
    _
  %s4 = ssub.s32 1, %s2
  %s5 = scalar_select 0, %s4, %s2
  $region1: #{tpu_custom_call.1} parent=0
    #allocation2 [shape = 'u8[1024]{0}', space=vmem, size = 0x400, scoped, tag = 'input window, operand 0, single buffered']
    #allocation3 [shape = 's32[1]{0}', space=sflag, size = 0x4, scoped, tag = 'scoped memory for tpu_custom_call.1']
    #allocation4 [shape = 's32[1]{0}', space=sflag, size = 0x4, scoped, tag = 'scoped memory for tpu_custom_call.1']
    #allocation5 [shape = 'u8[2048]{0}', space=vmem, size = 0x800, scoped, tag = 'output window, operand 0, single buffered']
    %6 = vsyncpa [#allocation3], 0
    %7 = vsyncpa [#allocation4], 0
    // Predicated region
    $region2: #{tpu_custom_call.1} parent=1 // pred_check
      _
    $region3: #{tpu_custom_call.1} parent=1 // pred_check_branch
      %9 = sbr.rel (0) target = $region5
    $region4: #{tpu_custom_call.1} parent=1 // pred_region
      %11 = vsyncadd [#allocation3], 0
      %s13 = sshll.u32 %s0, 4
      %s14 = int_to_ptr.hbm [resolvable:$true] %s13
      %s15 = sshll.u32 [#allocation2], 4
      %s16 = int_to_ptr.vmem [resolvable:$true] %s15
      %18 = dma.hbm_to_vmem [thread:$0]  %s14, 32, %s16, [#allocation3]
    $region5: #{tpu_custom_call.1} parent=1 // pred_fallthru
      _
    // Predicated region
    $region6: #{tpu_custom_call.1} parent=1 // pred_check
      _
    $region7: #{tpu_custom_call.1} parent=1 // pred_check_branch
      %20 = sbr.rel (0) target = $region9
    $region8: #{tpu_custom_call.1} parent=1 // pred_region
      %22 = dma.done [#allocation3], 32
    $region9: #{tpu_custom_call.1} parent=1 // pred_fallthru
      _
    %v23 = vld [vmem:[#allocation2] sm:$0x3]
    %v25 = vperm.slane %v23, 0
    %v26 = vperm.slane %v23, 1
    %v27 = vrot.slane %v26, 6
    %vm28 = vcmask 1041408
    %v29 = vsel %vm28, %v25, %v27
    %31 = vst [vmem:[#allocation5] sm:$0xf] %v29
    // Predicated region
    $region10: #{tpu_custom_call.1} parent=1 // pred_check
      _
    $region11: #{tpu_custom_call.1} parent=1 // pred_check_branch
      %33 = sbr.rel (0) target = $region13
    $region12: #{tpu_custom_call.1} parent=1 // pred_region
      %35 = vsyncadd [#allocation4], 0
      %s37 = sshll.u32 [#allocation5], 4
      %s38 = int_to_ptr.vmem [resolvable:$true] %s37
      %s39 = sshll.u32 %s1, 4
      %s40 = int_to_ptr.hbm [resolvable:$true] %s39
      %42 = dma.vmem_to_hbm [thread:$0]  %s38, 64, %s40, [#allocation4]
    $region13: #{tpu_custom_call.1} parent=1 // pred_fallthru
      _
    // Predicated region
    $region14: #{tpu_custom_call.1} parent=1 // pred_check
      _
    $region15: #{tpu_custom_call.1} parent=1 // pred_check_branch
      %44 = sbr.rel (0) target = $region17
    $region16: #{tpu_custom_call.1} parent=1 // pred_region
      %46 = dma.done [#allocation4], 64
    $region17: #{tpu_custom_call.1} parent=1 // pred_fallthru
      _
    %47 = vsyncpa [#allocation3], 1
    %48 = vsyncpa [#allocation4], 1

</llo_original>
